<compile_context>
chip_gen: v7x
topology: tpu7x:2x2x1
jax: 0.10.0
libtpu: 0.0.40
codegen_flags: <defaults>
</compile_context>

<pallas_src>
import functools

import jax
import jax.numpy as jnp
import numpy as np
from jax import lax
from jax.experimental import pallas as pl
from jax.experimental.pallas import tpu as pltpu

# Input per-tensor fake-quant params (constants of the module).
IN_SCALE = 1.0
IN_ZP = 25
IN_QMIN = 0
IN_QMAX = 255
# Weight per-channel fake-quant params.
W_QMIN = -128
W_QMAX = 127

_O_SUB = 8                              # f32 sublane tile: pad 3 output channels -> 8
_LANE = 128
_VMEM_TILE_BUDGET = 8 * 1024 * 1024     # double-buffered per-step tile budget (all gens)


def _qconv_gemm_kernel(p_ref, w_ref, s_ref, o_ref):
    """out[o, m] = (sum_k w[k, o] * p[k, m]) * s[o].

    p_ref : [K_pad, TM]     bf16  integer-valued fake-quantized patches (xq - in_zp)
    w_ref : [K_pad, O_SUB]  bf16  integer-valued fake-quantized weight  (wq - w_zp)
    s_ref : [O_SUB, 1]      f32   combined dequant scale in_scale * w_scale[o] (0 on pad rows)
    o_ref : [O_SUB, TM]     f32
    """
    acc = lax.dot_general(
        w_ref[...], p_ref[...],
        dimension_numbers=(((0,), (0,)), ((), ())),   # contract K (dim 0 of both): no patch transpose
        preferred_element_type=jnp.float32)            # -> [O_SUB, TM], f32 accumulation
    o_ref[...] = acc * s_ref[...]                      # per-channel dequant (lane broadcast)


def model_with_fake_quant(x, weight, weight_scale, weight_zero_point, *, tm=None):
    """x: [N, C, H, W] f32 (NCHW, like PyTorch). Returns y: [N, O, OH, OW] f32."""
    x = x.astype(jnp.float32)
    weight = weight.astype(jnp.float32)
    o_ch, c_ch, kh, kw = weight.shape
    n, _, h, w = x.shape
    oh, ow = h - kh + 1, w - kw + 1
    m = n * oh * ow
    k = c_ch * kh * kw

    # ---- input fake-quant (scale factored out) applied once to the tiny x, cast to
    #      bf16 there (exact: integer values, |.| <= 256) so im2col runs at half width.
    xq = jnp.clip(jnp.round(x / IN_SCALE) + IN_ZP, IN_QMIN, IN_QMAX) - IN_ZP
    xq = xq.astype(jnp.bfloat16)

    # ---- weight fake-quant (tiny, static). zero_point forced integral (PyTorch casts
    #      zp to an int dtype); invariant: |wq - zp| <= 256 so bf16 stays bit-exact.
    ws = weight_scale.astype(jnp.float32).reshape(-1, 1, 1, 1)
    zp = jnp.round(weight_zero_point.astype(jnp.float32)).reshape(-1, 1, 1, 1)
    wq = jnp.clip(jnp.round(weight / ws) + zp, W_QMIN, W_QMAX) - zp     # integer-valued

    # ---- im2col directly in [K, M] orientation; feature order is (C, KH, KW),
    #      matching weight.reshape(O, C*KH*KW) flattening.
    patches = lax.conv_general_dilated_patches(
        xq, filter_shape=(kh, kw), window_strides=(1, 1), padding="VALID",
        dimension_numbers=("NCHW", "OIHW", "CNHW"))                     # [K, N, OH, OW] bf16
    patches = patches.reshape(k, m)

    # ---- tiling: K gets sublane padding only; M is the lane dim.
    k_pad = pl.cdiv(k, 16) * 16                      # bf16 sublane tile
    per_m_bytes = 2 * (k_pad * 2 + _O_SUB * 4)       # double-buffered patches(bf16)+out(f32) per col
    tm_budget = max(_LANE, (_VMEM_TILE_BUDGET // per_m_bytes) // _LANE * _LANE)
    m_ceil = pl.cdiv(m, _LANE) * _LANE
    if tm is None:
        # single grid step when the whole GEMM fits; else lane-dense tiles <= 2048
        tm = min(m_ceil, tm_budget, 2048)
    tm = max(_LANE, pl.cdiv(tm, _LANE) * _LANE)
    m_pad = pl.cdiv(m, tm) * tm
    grid_m = m_pad // tm

    patches_p = jnp.pad(patches, ((0, k_pad - k), (0, m_pad - m)))                # bf16
    w_mat = jnp.pad(wq.reshape(o_ch, k).T,
                    ((0, k_pad - k), (0, _O_SUB - o_ch))).astype(jnp.bfloat16)    # [K_pad, 8]
    scale = jnp.pad((IN_SCALE * weight_scale.astype(jnp.float32)).reshape(o_ch, 1),
                    ((0, _O_SUB - o_ch), (0, 0)))                                 # [8, 1], pad rows 0

    # True (unpadded) cost so XLA does not mis-rank this tiny kernel.
    cost = pl.CostEstimate(
        flops=2 * m * k * o_ch,
        transcendentals=0,
        bytes_accessed=m * k * 2 + k * o_ch * 2 + o_ch * 4 + m * o_ch * 4)

    out = pl.pallas_call(
        _qconv_gemm_kernel,
        out_shape=jax.ShapeDtypeStruct((_O_SUB, m_pad), jnp.float32),
        grid=(grid_m,),
        in_specs=[
            pl.BlockSpec((k_pad, tm), lambda i: (0, i)),        # patches: tiled over lanes (M)
            pl.BlockSpec((k_pad, _O_SUB), lambda i: (0, 0)),    # weight: VMEM-resident
            pl.BlockSpec((_O_SUB, 1), lambda i: (0, 0)),        # dequant scale: resident
        ],
        out_specs=pl.BlockSpec((_O_SUB, tm), lambda i: (0, i)),  # lane-dense [8, TM] writeback
        compiler_params=pltpu.CompilerParams(
            dimension_semantics=("parallel",) if grid_m > 1 else ("arbitrary",),
            vmem_limit_bytes=32 * 1024 * 1024),
        cost_estimate=cost,
    )(patches_p, w_mat, scale)

    y = out[:o_ch, :m].reshape(o_ch, n, oh, ow)      # [O, N, OH, OW]
    return y.transpose(1, 0, 2, 3)                   # back to NCHW


def _reference(x, weight, weight_scale, weight_zero_point):
    """Pure-JAX reference of the same forward pass (HIGHEST-precision conv)."""
    xq = jnp.clip(jnp.round(x / IN_SCALE) + IN_ZP, IN_QMIN, IN_QMAX)
    xfq = (xq - IN_ZP) * IN_SCALE
    s = weight_scale.reshape(-1, 1, 1, 1)
    zp = jnp.round(weight_zero_point).reshape(-1, 1, 1, 1)
    wq = jnp.clip(jnp.round(weight / s) + zp, W_QMIN, W_QMAX)
    wfq = (wq - zp) * s
    return lax.conv_general_dilated(
        xfq, wfq, window_strides=(1, 1), padding="VALID",
        dimension_numbers=("NCHW", "OIHW", "NCHW"),
        precision=lax.Precision.HIGHEST)


if __name__ == "__main__":
    key = jax.random.PRNGKey(0)
    k_x, k_w, k_s = jax.random.split(key, 3)

    # Parameter shapes from the module's __init__.  Positive weight scales are used
    # (realistic fake-quant usage); a ~0/negative randn scale blows up w/scale
    # identically in kernel and reference but matches no real quantized model.
    weight = jax.random.normal(k_w, (3, 4, 3, 3), dtype=jnp.float32)
    weight_scale = jax.random.uniform(k_s, (3,), dtype=jnp.float32,
                                      minval=0.05, maxval=0.5)
    weight_zero_point = jnp.zeros((3,), dtype=jnp.float32)

    # Input: N=2, C=4 (required by the weight), H=W=16.
    x = jax.random.normal(k_x, (2, 4, 16, 16), dtype=jnp.float32) * 10.0

    model_fn = jax.jit(functools.partial(model_with_fake_quant))
    y = jax.block_until_ready(model_fn(x, weight, weight_scale, weight_zero_point))
    assert y.shape == (2, 3, 14, 14), y.shape

    y_ref = jax.block_until_ready(
        _reference(x, weight, weight_scale, weight_zero_point))
    # Kernel value is s * (exact integer sum); remaining deviation is the reference
    # conv's own per-term f32 rounding, so tolerances are set slightly above that.
    np.testing.assert_allclose(np.asarray(y), np.asarray(y_ref),
                               rtol=2e-3, atol=2e-2)

    print("KERNEL_OK")
</pallas_src>

<mosaic_0001>
module attributes {stable_mosaic.version = 11 : i64} {
  func.func @_qconv_gemm_kernel(%arg0: i32, %arg1: memref<48x512xbf16, #tpu.memory_space<vmem>>, %arg2: memref<48x8xbf16, #tpu.memory_space<vmem>>, %arg3: memref<8x1xf32, #tpu.memory_space<vmem>>, %arg4: memref<8x512xf32, #tpu.memory_space<vmem>>) attributes {dimension_semantics = [#tpu.dimension_semantics<arbitrary>], iteration_bounds = array<i64: 1>, scalar_prefetch = 0 : i64, scratch_operands = 0 : i64, tpu.core_type = #tpu.core_type<tc>, window_params = [{transform_indices = @transform_0, window_bounds = array<i64: 48, 512>}, {pipeline_mode = #tpu.pipeline_mode<synchronous>, transform_indices = @transform_1, window_bounds = array<i64: 48, 8>}, {pipeline_mode = #tpu.pipeline_mode<synchronous>, transform_indices = @transform_2, window_bounds = array<i64: 8, 1>}, {transform_indices = @transform_3, window_bounds = array<i64: 8, 512>}]} {
    %c0 = arith.constant 0 : index
    %c0_0 = arith.constant 0 : index
    %0 = vector.load %arg2[%c0, %c0_0] : memref<48x8xbf16, #tpu.memory_space<vmem>>, vector<48x8xbf16>
    %c0_1 = arith.constant 0 : index
    %c0_2 = arith.constant 0 : index
    %1 = vector.load %arg1[%c0_1, %c0_2] : memref<48x512xbf16, #tpu.memory_space<vmem>>, vector<48x512xbf16>
    %cst = arith.constant dense<0.000000e+00> : vector<8x512xf32>
    %2 = tpu.matmul %0, %1, %cst {dimension_numbers = #tpu.dot_dimension_numbers<[0], [0], [1], [1], [0, 1, 1, 1], [], []>} : vector<48x8xbf16>, vector<48x512xbf16>, vector<8x512xf32> -> vector<8x512xf32>
    %c0_3 = arith.constant 0 : index
    %c0_4 = arith.constant 0 : index
    %3 = vector.load %arg3[%c0_3, %c0_4] : memref<8x1xf32, #tpu.memory_space<vmem>>, vector<8x1xf32>
    %4 = vector.broadcast %3 : vector<8x1xf32> to vector<8x512xf32>
    %5 = arith.mulf %2, %4 : vector<8x512xf32>
    %c0_5 = arith.constant 0 : index
    %c0_6 = arith.constant 0 : index
    %6 = vector.load %arg4[%c0_5, %c0_6] : memref<8x512xf32, #tpu.memory_space<vmem>>, vector<8x512xf32>
    tpu.vector_store %arg4[%c0_5, %c0_6], %5 {strides = array<i32>} : memref<8x512xf32, #tpu.memory_space<vmem>>, vector<8x512xf32>,
    return
  }
  func.func @transform_0(%arg0: i32) -> (i32, i32) {
    %c0_i32 = arith.constant 0 : i32
    %c0_i32_0 = arith.constant 0 : i32
    return %c0_i32, %arg0 : i32, i32
  }
  func.func @transform_1(%arg0: i32) -> (i32, i32) {
    %c0_i32 = arith.constant 0 : i32
    %c0_i32_0 = arith.constant 0 : i32
    %c0_i32_1 = arith.constant 0 : i32
    return %c0_i32, %c0_i32_0 : i32, i32
  }
  func.func @transform_2(%arg0: i32) -> (i32, i32) {
    %c0_i32 = arith.constant 0 : i32
    %c0_i32_0 = arith.constant 0 : i32
    %c0_i32_1 = arith.constant 0 : i32
    return %c0_i32, %c0_i32_0 : i32, i32
  }
  func.func @transform_3(%arg0: i32) -> (i32, i32) {
    %c0_i32 = arith.constant 0 : i32
    %c0_i32_0 = arith.constant 0 : i32
    return %c0_i32, %arg0 : i32, i32
  }
}

</mosaic_0001>

<llo_original>
// kernel: model_with_fake_quant.1
$region0: #{model_with_fake_quant.1}
  #allocation0 [shape = 'u32[]', space=smem, size = 0x4, offset = 0x4, fixed_abs, tag = 'smem constant byte address 0x4 - core index']
  #allocation1 [shape = 'u32[144,128]{1,0:T(1,128)}', space=vmem, size = 0x12000, scoped, tag = 'internal scratch']
  %s0 = inlined_call_operand.vmem [shape: bf16[48,512], index: 0, kind: input, shape index: {}]
  %s1 = inlined_call_operand.vmem [shape: bf16[48,8], index: 1, kind: input, shape index: {}]
  %s2 = inlined_call_operand.vmem [shape: f32[8,1], index: 2, kind: input, shape index: {}]
  %s3 = inlined_call_operand.vmem [shape: f32[8,512], index: 3, kind: output, shape index: {}]
  %s4 = sld [smem:[#allocation0]]
  $region22: #{model_with_fake_quant.1} parent=0
    _
  %s6 = ssub.s32 1, %s4
  %s7 = scalar_select 0, %s6, %s4
  // Predicated region
  $region2: #{model_with_fake_quant.1} parent=0 // pred_check
    _
  $region3: #{model_with_fake_quant.1} parent=0 // pred_check_branch
    %9 = sbr.rel (0) target = $region5
  $region4: #{model_with_fake_quant.1} parent=0 // pred_region
    _
  $region5: #{model_with_fake_quant.1} parent=0 // pred_fallthru
    _
  // Predicated region
  $region6: #{model_with_fake_quant.1} parent=0 // pred_check
    _
  $region7: #{model_with_fake_quant.1} parent=0 // pred_check_branch
    %11 = sbr.rel (0) target = $region9
  $region8: #{model_with_fake_quant.1} parent=0 // pred_region
    _
  $region9: #{model_with_fake_quant.1} parent=0 // pred_fallthru
    _
  // Predicated region
  $region10: #{model_with_fake_quant.1} parent=0 // pred_check
    _
  $region11: #{model_with_fake_quant.1} parent=0 // pred_check_branch
    %13 = sbr.rel (0) target = $region13
  $region12: #{model_with_fake_quant.1} parent=0 // pred_region
    _
  $region13: #{model_with_fake_quant.1} parent=0 // pred_fallthru
    _
  %v15 = vld [vmem:[%s1] sm:$0xf]
  %v16 = vld [vmem:[%s1 + $0x4] sm:$0xf]
  %v17 = vld [vmem:[%s1 + $0x8] sm:$0xf]
  %v18 = vld [vmem:[%s1 + $0xc] sm:$0xf]
  %v19 = vld [vmem:[%s1 + $0x10] sm:$0xf]
  %v20 = vld [vmem:[%s1 + $0x14] sm:$0xf]
  %v21 = vld [vmem:[%s0] sm:$0xff]
  %v22 = vld [vmem:[%s0 + $0x8] sm:$0xff]
  %v23 = vld [vmem:[%s0 + $0x10] sm:$0xff]
  %v24 = vld [vmem:[%s0 + $0x18] sm:$0xff]
  %v25 = vld [vmem:[%s0 + $0x20] sm:$0xff]
  %v26 = vld [vmem:[%s0 + $0x28] sm:$0xff]
  %v27 = vld [vmem:[%s0 + $0x30] sm:$0xff]
  %v28 = vld [vmem:[%s0 + $0x38] sm:$0xff]
  %v29 = vld [vmem:[%s0 + $0x40] sm:$0xff]
  %v30 = vld [vmem:[%s0 + $0x48] sm:$0xff]
  %v31 = vld [vmem:[%s0 + $0x50] sm:$0xff]
  %v32 = vld [vmem:[%s0 + $0x58] sm:$0xff]
  %v39 = vunpack.c.l.b16 %v15
  %v40 = vunpack.c.l.b16 %v16
  %v41 = vunpack.c.l.b16 %v17
  %v42 = vunpack.c.l.b16 %v18
  %v43 = vunpack.c.l.b16 %v19
  %v44 = vunpack.c.l.b16 %v20
  %v45 = vpack.c.b16 %v40, %v39
  %v46 = vpack.c.b16 %v42, %v41
  %v47 = vpack.c.b16 %v44, %v43
  %51 = vxpose.xlu0.c.b16.start [1/8] %v45, 128
  %52 = vxpose.xlu0.c.b16.cont [2/8] %v46, 128
  %53 = vxpose.xlu0.c.b16.cont [3/8] %v47, 128
  %54 = vxpose.xlu0.c.b16.cont [4/8] 0, 128
  %55 = vxpose.xlu0.c.b16.cont [5/8] 0, 128
  %56 = vxpose.xlu0.c.b16.cont [6/8] 0, 128
  %57 = vxpose.xlu0.c.b16.cont [7/8] 0, 128
  %58 = vxpose.xlu0.c.b16.end [8/8] 0, 128
  %v59 = vpop.trf.xlu0
  %v60 = vpop.trf.xlu0
  %v61 = vpop.trf.xlu0
  %v62 = vpop.trf.xlu0
  %v63 = vpop.trf.xlu0
  %v64 = vpop.trf.xlu0
  %v65 = vpop.trf.xlu0
  %v66 = vpop.trf.xlu0
  %v79 = vunpack.c.l.b16 %v21
  %v80 = vunpack.c.h.b16 %v21
  %v81 = vunpack.c.l.b16 %v22
  %v82 = vunpack.c.h.b16 %v22
  %v83 = vunpack.c.l.b16 %v23
  %v84 = vunpack.c.h.b16 %v23
  %v85 = vunpack.c.l.b16 %v24
  %v86 = vunpack.c.h.b16 %v24
  %v87 = vunpack.c.l.b16 %v25
  %v88 = vunpack.c.h.b16 %v25
  %v89 = vunpack.c.l.b16 %v26
  %v90 = vunpack.c.h.b16 %v26
  %v91 = vunpack.c.l.b16 %v27
  %v92 = vunpack.c.h.b16 %v27
  %v93 = vunpack.c.l.b16 %v28
  %v94 = vunpack.c.h.b16 %v28
  %v95 = vunpack.c.l.b16 %v29
  %v96 = vunpack.c.h.b16 %v29
  %v97 = vunpack.c.l.b16 %v30
  %v98 = vunpack.c.h.b16 %v30
  %v99 = vunpack.c.l.b16 %v31
  %v100 = vunpack.c.h.b16 %v31
  %v101 = vunpack.c.l.b16 %v32
  %v102 = vunpack.c.h.b16 %v32
  %v103 = vpack.c.b16 %v83, %v79
  %v104 = vpack.c.b16 %v84, %v80
  %v105 = vpack.c.b16 %v85, %v81
  %v106 = vpack.c.b16 %v86, %v82
  %v107 = vpack.c.b16 %v91, %v87
  %v108 = vpack.c.b16 %v92, %v88
  %v109 = vpack.c.b16 %v93, %v89
  %v110 = vpack.c.b16 %v94, %v90
  %v111 = vpack.c.b16 %v99, %v95
  %v112 = vpack.c.b16 %v100, %v96
  %v113 = vpack.c.b16 %v101, %v97
  %v114 = vpack.c.b16 %v102, %v98
  %vm127 = vcmask 392192
  %v129 = vsel %vm127, %v59, 0
  %131 = vmatprep.subr.bf16.mxu0 %v104
  %132 = vmatpush1.bf16.msra.mxu0 %v103
  %133 = vmatprep.subr.bf16.mxu0 %v108
  %134 = vmatpush1.bf16.msra.mxu0 %v107
  %135 = vmatprep.subr.bf16.mxu0 %v112
  %136 = vmatpush1.bf16.msra.mxu0 %v111
  %137 = vmatprep.subr.bf16.mxu0 0
  %138 = vmatpush1.bf16.msra.mxu0 0
  %139 = vmatprep.subr.bf16.mxu0 0
  %140 = vmatpush1.bf16.msra.mxu0 0
  %141 = vmatprep.subr.bf16.mxu0 0
  %142 = vmatpush1.bf16.msra.mxu0 0
  %143 = vmatprep.subr.bf16.mxu0 0
  %144 = vmatpush1.bf16.msra.mxu0 0
  %145 = vmatprep.subr.bf16.mxu0 0
  %146 = vmatpush1.bf16.msra.mxu0 0
  %147 = vmatprep.subr.bf16.mxu0 0
  %148 = vmatpush1.bf16.msra.mxu0 0
  %149 = vmatprep.subr.bf16.mxu0 0
  %150 = vmatpush1.bf16.msra.mxu0 0
  %151 = vmatprep.subr.bf16.mxu0 0
  %152 = vmatpush1.bf16.msra.mxu0 0
  %153 = vmatprep.subr.bf16.mxu0 0
  %154 = vmatpush1.bf16.msra.mxu0 0
  %155 = vmatprep.subr.bf16.mxu0 0
  %156 = vmatpush1.bf16.msra.mxu0 0
  %157 = vmatprep.subr.bf16.mxu0 0
  %158 = vmatpush1.bf16.msra.mxu0 0
  %159 = vmatprep.subr.bf16.mxu0 0
  %160 = vmatpush1.bf16.msra.mxu0 0
  %161 = vmatprep.subr.bf16.mxu0 0
  %162 = vmatpush1.bf16.msra.mxu0 0
  %163 = vmatprep.mubr.bf16.mxu0 0
  %164 = vmatmul.mubr.bf16.gmra.mrb[0].mxu0 %v129
  %v165 = vpop.f32.mrb[0].mxu0
  %v166 = vadd.f32 0.0, %v165
  %v167 = vpop.f32.mrb[0].mxu0
  %v168 = vadd.f32 0.0, %v167
  %v169 = vpop.f32.mrb[0].mxu0
  %v170 = vpop.f32.mrb[0].mxu0
  %171 = vdwg.mxu0
  %172 = vmatprep.subr.bf16.mxu0 %v106
  %173 = vmatpush1.bf16.msra.mxu0 %v105
  %174 = vmatprep.subr.bf16.mxu0 %v110
  %175 = vmatpush1.bf16.msra.mxu0 %v109
  %176 = vmatprep.subr.bf16.mxu0 %v114
  %177 = vmatpush1.bf16.msra.mxu0 %v113
  %178 = vmatprep.subr.bf16.mxu0 0
  %179 = vmatpush1.bf16.msra.mxu0 0
  %180 = vmatprep.subr.bf16.mxu0 0
  %181 = vmatpush1.bf16.msra.mxu0 0
  %182 = vmatprep.subr.bf16.mxu0 0
  %183 = vmatpush1.bf16.msra.mxu0 0
  %184 = vmatprep.subr.bf16.mxu0 0
  %185 = vmatpush1.bf16.msra.mxu0 0
  %186 = vmatprep.subr.bf16.mxu0 0
  %187 = vmatpush1.bf16.msra.mxu0 0
  %188 = vmatprep.subr.bf16.mxu0 0
  %189 = vmatpush1.bf16.msra.mxu0 0
  %190 = vmatprep.subr.bf16.mxu0 0
  %191 = vmatpush1.bf16.msra.mxu0 0
  %192 = vmatprep.subr.bf16.mxu0 0
  %193 = vmatpush1.bf16.msra.mxu0 0
  %194 = vmatprep.subr.bf16.mxu0 0
  %195 = vmatpush1.bf16.msra.mxu0 0
  %196 = vmatprep.subr.bf16.mxu0 0
  %197 = vmatpush1.bf16.msra.mxu0 0
  %198 = vmatprep.subr.bf16.mxu0 0
  %199 = vmatpush1.bf16.msra.mxu0 0
  %200 = vmatprep.subr.bf16.mxu0 0
  %201 = vmatpush1.bf16.msra.mxu0 0
  %202 = vmatprep.subr.bf16.mxu0 0
  %203 = vmatpush1.bf16.msra.mxu0 0
  %204 = vmatprep.mubr.bf16.mxu0 0
  %205 = vmatmul.mubr.bf16.gmra.mrb[0].mxu0 %v129
  %v206 = vpop.f32.mrb[0].mxu0
  %v207 = vadd.f32 0.0, %v206
  %v208 = vpop.f32.mrb[0].mxu0
  %v209 = vadd.f32 0.0, %v208
  %v210 = vpop.f32.mrb[0].mxu0
  %v211 = vpop.f32.mrb[0].mxu0
  %212 = vdwg.mxu0
  %v213 = vld [vmem:[%s2] sm:$0xff]
  %215 = vset.pattern.permute.xlu0 0
  %216 = vperm.xlu0 %215, %v213
  %v217 = vpop.permute.xlu0 %216
  %v219 = vmul.f32 %v166, %v217
  %v220 = vmul.f32 %v168, %v217
  %v221 = vmul.f32 %v207, %v217
  %v222 = vmul.f32 %v209, %v217
  %223 = vst [vmem:[%s3] sm:$0xff] %v219
  %224 = vst [vmem:[%s3 + $0x8] sm:$0xff] %v220
  %225 = vst [vmem:[%s3 + $0x10] sm:$0xff] %v221
  %226 = vst [vmem:[%s3 + $0x18] sm:$0xff] %v222
  // Predicated region
  $region14: #{model_with_fake_quant.1} parent=0 // pred_check
    _
  $region15: #{model_with_fake_quant.1} parent=0 // pred_check_branch
    %228 = sbr.rel (0) target = $region17
  $region16: #{model_with_fake_quant.1} parent=0 // pred_region
    _
  $region17: #{model_with_fake_quant.1} parent=0 // pred_fallthru
    _
  // Predicated region
  $region18: #{model_with_fake_quant.1} parent=0 // pred_check
    _
  $region19: #{model_with_fake_quant.1} parent=0 // pred_check_branch
    %230 = sbr.rel (0) target = $region21
  $region20: #{model_with_fake_quant.1} parent=0 // pred_region
    _
  $region21: #{model_with_fake_quant.1} parent=0 // pred_fallthru
    _

</llo_original>
